<compile_context>
chip_gen: v6e
topology: v6e:2x2x1
jax: 0.10.0
libtpu: 0.0.40
codegen_flags: <defaults>
</compile_context>

<pallas_src>
import functools

import jax
import jax.numpy as jnp
from jax import lax
from jax.experimental import pallas as pl
from jax.experimental.pallas import tpu as pltpu


# ----------------------------------------------------------------------------
# Pallas kernel
# ----------------------------------------------------------------------------
def _conv_bn_relu_kernel(xph_ref, w_ref, shift_ref, o_ref, *, K, stride, L_out, relu):
    # xph_ref:   (1, stride, Cin, Lq)  phase-de-interleaved padded input
    # w_ref:     (Cout, K*Cin)         BN-scale-folded weights (tap-major rows)
    # shift_ref: (Cout, 1)             folded conv bias + BN shift (f32)
    # o_ref:     (1, Cout, L_out)
    taps = []
    for k in range(K):                         # static unroll; static slices only
        p = k % stride
        off = k // stride
        taps.append(xph_ref[0, p, :, pl.ds(off, L_out)])        # (Cin, L_out)
    rhs = taps[0] if K == 1 else jnp.concatenate(taps, axis=0)  # (K*Cin, L_out)
    acc = jnp.dot(w_ref[...], rhs, preferred_element_type=jnp.float32)
    y = acc + shift_ref[...]                   # single add epilogue (scale folded)
    if relu:
        y = jnp.maximum(y, 0.0)
    o_ref[0] = y.astype(o_ref.dtype)


# ----------------------------------------------------------------------------
# Wrapper: Conv1d (+ eval BN folded) + ReLU  ==  ConvBNReLU.forward
# ----------------------------------------------------------------------------
def conv_bn_relu(x, params, *, stride, groups=1, relu=True,
                 compute_dtype=None, eps=1e-5):
    """x: (N, Cin, L) f32.  params: {'w':(Cout,Cin//groups,K), 'b','gamma','beta',
    'mean','var': (Cout,)}.  stride/groups are static Python ints.  Padding follows
    the PyTorch module: 'same' when stride == 1, else (K - stride)//2."""
    N, Cin, L = x.shape
    w = params['w']
    Cout, Cin_pg, K = w.shape

    # ---- host-side parameter folding (done once per call, outside the kernel) ----
    if groups > 1:  # grouped conv -> dense block-diagonal weight (tiny channels)
        Cout_pg = Cout // groups
        dense = jnp.zeros((Cout, Cin, K), w.dtype)
        for g in range(groups):
            dense = dense.at[g * Cout_pg:(g + 1) * Cout_pg,
                             g * Cin_pg:(g + 1) * Cin_pg, :].set(
                                 w[g * Cout_pg:(g + 1) * Cout_pg])
        w_dense = dense
    else:
        w_dense = w
    scale = params['gamma'] / jnp.sqrt(params['var'] + eps)           # (Cout,)
    w_fold = w_dense * scale[:, None, None]                           # fold BN scale
    shift = params['beta'] + scale * (params['b'] - params['mean'])   # (Cout,)
    # (Cout, Cin, K) -> (Cout, K*Cin), rows tap-major to match kernel rhs layout
    w2 = jnp.transpose(w_fold, (0, 2, 1)).reshape(Cout, K * Cin)

    # ---- padding (matches nn.Conv1d semantics used by the module) ----
    if stride == 1:
        total = K - 1
        pad_l, pad_r = total // 2, total - total // 2                 # 'same'
    else:
        pad_l = pad_r = (K - stride) // 2
    L_out = (L + pad_l + pad_r - K) // stride + 1

    # ---- phase de-interleave: no K-fold duplication (same bytes as padded x) ----
    Lp = L + pad_l + pad_r
    Lq = -(-Lp // stride)                                             # ceil div
    x_pad = jnp.pad(x, ((0, 0), (0, 0), (pad_l, pad_r + (Lq * stride - Lp))))
    x_ph = x_pad.reshape(N, Cin, Lq, stride).transpose(0, 3, 1, 2)    # (N,s,Cin,Lq)

    if compute_dtype is not None:
        x_ph = x_ph.astype(compute_dtype)
        w2 = w2.astype(compute_dtype)
    shift = shift.astype(jnp.float32)[:, None]                        # (Cout, 1)

    kernel = functools.partial(_conv_bn_relu_kernel, K=K, stride=stride,
                               L_out=L_out, relu=relu)
    return pl.pallas_call(
        kernel,
        out_shape=jax.ShapeDtypeStruct((N, Cout, L_out), x.dtype),
        grid=(N,),
        in_specs=[
            pl.BlockSpec((1, stride, Cin, Lq), lambda n: (n, 0, 0, 0)),
            pl.BlockSpec((Cout, K * Cin), lambda n: (0, 0)),
            pl.BlockSpec((Cout, 1), lambda n: (0, 0)),
        ],
        out_specs=pl.BlockSpec((1, Cout, L_out), lambda n: (n, 0, 0)),
        compiler_params=pltpu.CompilerParams(
            dimension_semantics=("parallel",)),
    )(x_ph, w2, shift)


# ----------------------------------------------------------------------------
# Pure-JAX reference (for correctness checking only)
# ----------------------------------------------------------------------------
def conv_bn_relu_reference(x, params, *, stride, groups=1, relu=True, eps=1e-5):
    w, b = params['w'], params['b']
    K = w.shape[2]
    if stride == 1:
        total = K - 1
        pad_l, pad_r = total // 2, total - total // 2
    else:
        pad_l = pad_r = (K - stride) // 2
    y = lax.conv_general_dilated(
        x, w, window_strides=(stride,), padding=[(pad_l, pad_r)],
        dimension_numbers=('NCH', 'OIH', 'NCH'), feature_group_count=groups)
    y = y + b[None, :, None]
    y = (y - params['mean'][None, :, None]) / jnp.sqrt(
        params['var'][None, :, None] + eps)
    y = y * params['gamma'][None, :, None] + params['beta'][None, :, None]
    if relu:
        y = jnp.maximum(y, 0.0)
    return y


def init_params(key, Cin, Cout, K, groups=1):
    kw, kb, kg, kbe, km, kv = jax.random.split(key, 6)
    fan_in = (Cin // groups) * K
    bound = 1.0 / (fan_in ** 0.5)
    return {
        'w': jax.random.uniform(kw, (Cout, Cin // groups, K), jnp.float32,
                                -bound, bound),
        'b': jax.random.uniform(kb, (Cout,), jnp.float32, -bound, bound),
        'gamma': 1.0 + 0.1 * jax.random.normal(kg, (Cout,), jnp.float32),
        'beta': 0.1 * jax.random.normal(kbe, (Cout,), jnp.float32),
        'mean': 0.1 * jax.random.normal(km, (Cout,), jnp.float32),
        'var': 1.0 + 0.1 * jax.random.uniform(kv, (Cout,), jnp.float32),
    }


# ----------------------------------------------------------------------------
if __name__ == "__main__":
    key = jax.random.PRNGKey(0)
    kx, kp1, kp2 = jax.random.split(key, 3)

    N, Cin, Cout, L = 2, 4, 8, 256
    x = jax.random.normal(kx, (N, Cin, L), jnp.float32)

    # Config A: stride=1 ('same' padding), ungrouped, f32 compute.
    K1 = 5
    p1 = init_params(kp1, Cin, Cout, K1, groups=1)
    fwd1 = jax.jit(functools.partial(conv_bn_relu, stride=1, groups=1))
    out1 = jax.block_until_ready(fwd1(x, p1))
    ref1 = conv_bn_relu_reference(x, p1, stride=1, groups=1)
    assert out1.shape == (N, Cout, L), out1.shape
    err1 = float(jnp.max(jnp.abs(out1 - ref1)))
    assert err1 < 1e-3, err1

    # Config B: stride=2 (integer padding), grouped conv, f32 compute.
    K2, stride2, groups2 = 4, 2, 2
    p2 = init_params(kp2, Cin, Cout, K2, groups=groups2)
    fwd2 = jax.jit(functools.partial(conv_bn_relu, stride=stride2, groups=groups2))
    out2 = jax.block_until_ready(fwd2(x, p2))
    ref2 = conv_bn_relu_reference(x, p2, stride=stride2, groups=groups2)
    L_out2 = (L + 2 * ((K2 - stride2) // 2) - K2) // stride2 + 1
    assert out2.shape == (N, Cout, L_out2), out2.shape
    err2 = float(jnp.max(jnp.abs(out2 - ref2)))
    assert err2 < 1e-3, err2

    # Config C: bf16 operands (perf path), f32 accumulate + f32 epilogue/store.
    fwd3 = jax.jit(functools.partial(conv_bn_relu, stride=1, groups=1,
                                     compute_dtype=jnp.bfloat16))
    out3 = jax.block_until_ready(fwd3(x, p1))
    err3 = float(jnp.max(jnp.abs(out3 - ref1)))
    assert err3 < 5e-2 * (float(jnp.max(jnp.abs(ref1))) + 1.0), err3

    assert bool(jnp.all(jnp.isfinite(out1)) & jnp.all(jnp.isfinite(out2)))
    print("KERNEL_OK")
</pallas_src>

<mosaic_0001>
module attributes {stable_mosaic.version = 11 : i64} {
  func.func @_conv_bn_relu_kernel(%arg0: i32, %arg1: memref<1x1x4x260xf32, #tpu.memory_space<vmem>>, %arg2: memref<8x20xf32, #tpu.memory_space<vmem>>, %arg3: memref<8x1xf32, #tpu.memory_space<vmem>>, %arg4: memref<1x8x256xf32, #tpu.memory_space<vmem>>) attributes {dimension_semantics = [#tpu.dimension_semantics<parallel>], iteration_bounds = array<i64: 2>, scalar_prefetch = 0 : i64, scratch_operands = 0 : i64, tpu.core_type = #tpu.core_type<tc>, window_params = [{transform_indices = @transform_0, window_bounds = array<i64: 1, 1, 4, 260>}, {pipeline_mode = #tpu.pipeline_mode<synchronous>, transform_indices = @transform_1, window_bounds = array<i64: 8, 20>}, {pipeline_mode = #tpu.pipeline_mode<synchronous>, transform_indices = @transform_2, window_bounds = array<i64: 8, 1>}, {transform_indices = @transform_3, window_bounds = array<i64: 1, 8, 256>}]} {
    %c0 = arith.constant 0 : index
    %c0_0 = arith.constant 0 : index
    %c0_1 = arith.constant 0 : index
    %c0_2 = arith.constant 0 : index
    %0 = vector.load %arg1[%c0, %c0_0, %c0_1, %c0_2] : memref<1x1x4x260xf32, #tpu.memory_space<vmem>>, vector<1x1x4x256xf32>
    %1 = vector.shape_cast %0 : vector<1x1x4x256xf32> to vector<4x256xf32>
    %c0_3 = arith.constant 0 : index
    %c0_4 = arith.constant 0 : index
    %c0_5 = arith.constant 0 : index
    %c1 = arith.constant 1 : index
    %2 = vector.load %arg1[%c0_3, %c0_4, %c0_5, %c1] : memref<1x1x4x260xf32, #tpu.memory_space<vmem>>, vector<1x1x4x256xf32>
    %3 = vector.shape_cast %2 : vector<1x1x4x256xf32> to vector<4x256xf32>
    %c0_6 = arith.constant 0 : index
    %c0_7 = arith.constant 0 : index
    %c0_8 = arith.constant 0 : index
    %c2 = arith.constant 2 : index
    %4 = vector.load %arg1[%c0_6, %c0_7, %c0_8, %c2] : memref<1x1x4x260xf32, #tpu.memory_space<vmem>>, vector<1x1x4x256xf32>
    %5 = vector.shape_cast %4 : vector<1x1x4x256xf32> to vector<4x256xf32>
    %c0_9 = arith.constant 0 : index
    %c0_10 = arith.constant 0 : index
    %c0_11 = arith.constant 0 : index
    %c3 = arith.constant 3 : index
    %6 = vector.load %arg1[%c0_9, %c0_10, %c0_11, %c3] : memref<1x1x4x260xf32, #tpu.memory_space<vmem>>, vector<1x1x4x256xf32>
    %7 = vector.shape_cast %6 : vector<1x1x4x256xf32> to vector<4x256xf32>
    %c0_12 = arith.constant 0 : index
    %c0_13 = arith.constant 0 : index
    %c0_14 = arith.constant 0 : index
    %c4 = arith.constant 4 : index
    %8 = vector.load %arg1[%c0_12, %c0_13, %c0_14, %c4] : memref<1x1x4x260xf32, #tpu.memory_space<vmem>>, vector<1x1x4x256xf32>
    %9 = vector.shape_cast %8 : vector<1x1x4x256xf32> to vector<4x256xf32>
    %10 = tpu.concatenate %1, %3, %5, %7, %9 in 0 : vector<4x256xf32>, vector<4x256xf32>, vector<4x256xf32>, vector<4x256xf32>, vector<4x256xf32> -> vector<20x256xf32>
    %c0_15 = arith.constant 0 : index
    %c0_16 = arith.constant 0 : index
    %11 = vector.load %arg2[%c0_15, %c0_16] : memref<8x20xf32, #tpu.memory_space<vmem>>, vector<8x20xf32>
    %cst = arith.constant dense<0.000000e+00> : vector<8x256xf32>
    %12 = tpu.matmul %11, %10, %cst {dimension_numbers = #tpu.dot_dimension_numbers<[1], [0], [0], [1], [0, 0, 1, 1], [], []>} : vector<8x20xf32>, vector<20x256xf32>, vector<8x256xf32> -> vector<8x256xf32>
    %c0_17 = arith.constant 0 : index
    %c0_18 = arith.constant 0 : index
    %13 = vector.load %arg3[%c0_17, %c0_18] : memref<8x1xf32, #tpu.memory_space<vmem>>, vector<8x1xf32>
    %14 = vector.broadcast %13 : vector<8x1xf32> to vector<8x256xf32>
    %15 = arith.addf %12, %14 : vector<8x256xf32>
    %cst_19 = arith.constant 0.000000e+00 : f32
    %16 = vector.broadcast %cst_19 : f32 to vector<8x256xf32>
    %17 = arith.maximumf %15, %16 : vector<8x256xf32>
    %c0_20 = arith.constant 0 : index
    %c0_21 = arith.constant 0 : index
    %c0_22 = arith.constant 0 : index
    %18 = vector.load %arg4[%c0_20, %c0_21, %c0_22] : memref<1x8x256xf32, #tpu.memory_space<vmem>>, vector<1x8x256xf32>
    %19 = vector.shape_cast %18 : vector<1x8x256xf32> to vector<8x256xf32>
    %20 = vector.shape_cast %17 : vector<8x256xf32> to vector<1x8x256xf32>
    tpu.vector_store %arg4[%c0_20, %c0_21, %c0_22], %20 {strides = array<i32>} : memref<1x8x256xf32, #tpu.memory_space<vmem>>, vector<1x8x256xf32>,
    return
  }
  func.func @transform_0(%arg0: i32) -> (i32, i32, i32, i32) {
    %c0_i32 = arith.constant 0 : i32
    %c0_i32_0 = arith.constant 0 : i32
    %c0_i32_1 = arith.constant 0 : i32
    %c0_i32_2 = arith.constant 0 : i32
    return %arg0, %c0_i32, %c0_i32_0, %c0_i32_1 : i32, i32, i32, i32
  }
  func.func @transform_1(%arg0: i32) -> (i32, i32) {
    %c0_i32 = arith.constant 0 : i32
    %c0_i32_0 = arith.constant 0 : i32
    %c0_i32_1 = arith.constant 0 : i32
    return %c0_i32, %c0_i32_0 : i32, i32
  }
  func.func @transform_2(%arg0: i32) -> (i32, i32) {
    %c0_i32 = arith.constant 0 : i32
    %c0_i32_0 = arith.constant 0 : i32
    %c0_i32_1 = arith.constant 0 : i32
    return %c0_i32, %c0_i32_0 : i32, i32
  }
  func.func @transform_3(%arg0: i32) -> (i32, i32, i32) {
    %c0_i32 = arith.constant 0 : i32
    %c0_i32_0 = arith.constant 0 : i32
    %c0_i32_1 = arith.constant 0 : i32
    return %arg0, %c0_i32, %c0_i32_0 : i32, i32, i32
  }
}

</mosaic_0001>

<llo_original>
// kernel: conv_bn_relu.1
$region0: #{conv_bn_relu.1}
  #allocation0 [shape = 'u32[]', space=smem, size = 0x4, offset = 0x4, fixed_abs, tag = 'smem constant byte address 0x4 - core index']
  #allocation1 [shape = 'u32[144,128]{1,0:T(1,128)}', space=vmem, size = 0x12000, scoped, tag = 'internal scratch']
  %s0 = inlined_call_operand.vmem [shape: f32[2,1,4,260], index: 0, kind: input, shape index: {}]
  %s1 = inlined_call_operand.vmem [shape: f32[8,20], index: 1, kind: input, shape index: {}]
  %s2 = inlined_call_operand.vmem [shape: f32[8,1], index: 2, kind: input, shape index: {}]
  %s3 = inlined_call_operand.hbm [shape: f32[2,8,256], index: 3, kind: output, shape index: {}]
  %s4 = sld [smem:[#allocation0]]
  $region45: #{conv_bn_relu.1} parent=0
    _
  %s6 = ssub.s32 1, %s4
  %s7 = scalar_select 0, %s6, %s4
  $region1: #{conv_bn_relu.1} parent=0
    #allocation2 [shape = 'u8[16384]{0}', space=vmem, size = 0x4000, scoped, tag = 'output window, operand 0']
    #allocation3 [shape = 's32[2]{0}', space=sflag, size = 0x8, scoped, tag = 'scoped memory for conv_bn_relu.1']
    %8 = vsyncpa [#allocation3], 0
    %s9 = scalar_lea.sflag [#allocation3], 1
    %10 = vsyncpa %s9, 0
    loop: start=0, step=1, limit=4
    $region2: #{conv_bn_relu.1} parent=1 // loop_pre_header
      _
    $region3: #{conv_bn_relu.1} parent=1 // loop_header
      %s12 = sphi 0, %s16
      %p13 = scmp.ge.s32.totalorder %s12, 4
      %s22 = sphi 0, %s24
      %s25 = sphi 0, %s22
      %s26 = sphi 0, %s25
      %s42 = sphi 0, %s26
      %s46 = sphi 0, %s46
      %s48 = sphi 0, %s46
      %s49 = sphi 0, %s48
      %s63 = sphi 0, %s49
      %s67 = sphi 0, %s67
      %s69 = sphi 0, %s67
      %s70 = sphi 0, %s69
      %s84 = sphi 0, %s70
      %s90 = sphi 0, %s92
      %s93 = sphi 0, %s90
      %s94 = sphi 0, %s93
      %s110 = sphi 0, %s94
    $region4: #{conv_bn_relu.1} parent=1 // loop_header_branch
      %15 = sbr.rel (%p13) target = $region8
    $region5: #{conv_bn_relu.1} parent=1 // loop_body
      %s17 = ssub.s32 %s12, 1
      %s18 = ssub.s32 %s12, 2
      %s19 = sadd.s32 %s12, 1
      %s20 = ssub.s32 %s12, %s19
      %p21 = scmp.eq.s32.totalorder %s20, 0
      %s23 = sadd.s32 %s22, 1
      %s24 = scalar_select %p21, %s22, %s23
      %p27 = pneg %p21
      %p28 = scmp.eq.s32.totalorder %s12, 1
      %p29 = por %p27, %p28
      %p30 = scmp.ne.s32.totalorder %s22, %s25
      %p31 = scmp.eq.s32.totalorder %s12, 0
      %p32 = por %p30, %p31
      %p33 = scmp.ne.s32.totalorder %s22, %s25
      %p34 = scmp.eq.s32.totalorder %s17, 1
      %p35 = por %p33, %p34
      %p36 = scmp.ne.s32.totalorder %s25, %s26
      %p37 = scmp.eq.s32.totalorder %s17, 0
      %p38 = por %p36, %p37
      %p39 = scmp.ne.s32.totalorder %s25, %s26
      %p40 = scmp.eq.s32.totalorder %s18, 1
      %p41 = por %p39, %p40
      %p43 = scmp.ne.s32.totalorder %s26, %s42
      %p44 = scmp.eq.s32.totalorder %s18, 0
      %p45 = por %p43, %p44
      %s47 = sadd.s32 %s46, 1
      %p50 = scmp.eq.s32.totalorder %s12, 1
      %p51 = scmp.ne.s32.totalorder %s46, %s48
      %p52 = scmp.eq.s32.totalorder %s12, 0
      %p53 = por %p51, %p52
      %p54 = scmp.ne.s32.totalorder %s46, %s48
      %p55 = scmp.eq.s32.totalorder %s17, 1
      %p56 = por %p54, %p55
      %p57 = scmp.ne.s32.totalorder %s48, %s49
      %p58 = scmp.eq.s32.totalorder %s17, 0
      %p59 = por %p57, %p58
      %p60 = scmp.ne.s32.totalorder %s48, %s49
      %p61 = scmp.eq.s32.totalorder %s18, 1
      %p62 = por %p60, %p61
      %p64 = scmp.ne.s32.totalorder %s49, %s63
      %p65 = scmp.eq.s32.totalorder %s18, 0
      %p66 = por %p64, %p65
      %s68 = sadd.s32 %s67, 1
      %p71 = scmp.eq.s32.totalorder %s12, 1
      %p72 = scmp.ne.s32.totalorder %s67, %s69
      %p73 = scmp.eq.s32.totalorder %s12, 0
      %p74 = por %p72, %p73
      %p75 = scmp.ne.s32.totalorder %s67, %s69
      %p76 = scmp.eq.s32.totalorder %s17, 1
      %p77 = por %p75, %p76
      %p78 = scmp.ne.s32.totalorder %s69, %s70
      %p79 = scmp.eq.s32.totalorder %s17, 0
      %p80 = por %p78, %p79
      %p81 = scmp.ne.s32.totalorder %s69, %s70
      %p82 = scmp.eq.s32.totalorder %s18, 1
      %p83 = por %p81, %p82
      %p85 = scmp.ne.s32.totalorder %s70, %s84
      %p86 = scmp.eq.s32.totalorder %s18, 0
      %p87 = por %p85, %p86
      %s88 = ssub.s32 %s12, %s19
      %p89 = scmp.eq.s32.totalorder %s88, 0
      %s91 = sadd.s32 %s90, 1
      %s92 = scalar_select %p89, %s90, %s91
      %p95 = pneg %p89
      %p96 = scmp.eq.s32.totalorder %s12, 1
      %p97 = por %p95, %p96
      %p98 = scmp.ne.s32.totalorder %s90, %s93
      %p99 = scmp.eq.s32.totalorder %s12, 0
      %p100 = por %p98, %p99
      %p101 = scmp.ne.s32.totalorder %s90, %s93
      %p102 = scmp.eq.s32.totalorder %s17, 1
      %p103 = por %p101, %p102
      %p104 = scmp.ne.s32.totalorder %s93, %s94
      %p105 = scmp.eq.s32.totalorder %s17, 0
      %p106 = por %p104, %p105
      %p107 = scmp.ne.s32.totalorder %s93, %s94
      %p108 = scmp.eq.s32.totalorder %s18, 1
      %p109 = por %p107, %p108
      %p111 = scmp.ne.s32.totalorder %s94, %s110
      %p112 = scmp.eq.s32.totalorder %s18, 0
      %p113 = por %p111, %p112
      %p114 = scmp.le.s32.totalorder 1, %s12
      %p115 = scmp.lt.s32.totalorder %s12, 3
      %p116 = pnand %p114, %p115
      %p117 = pneg %p116
      // Predicated region
      $region9: #{conv_bn_relu.1} parent=5 // pred_check
        _
      $region10: #{conv_bn_relu.1} parent=5 // pred_check_branch
        %119 = sbr.rel (%p116) target = $region12
      $region11: #{conv_bn_relu.1} parent=5 // pred_region
        %s120 = ssub.s32 %s12, 1
        // Predicated region
        $region13: #{conv_bn_relu.1} parent=11 // pred_check
          %p121 = pneg %p59
        $region14: #{conv_bn_relu.1} parent=11 // pred_check_branch
          %123 = sbr.rel (%p121) target = $region16
        $region15: #{conv_bn_relu.1} parent=11 // pred_region
          _
        $region16: #{conv_bn_relu.1} parent=11 // pred_fallthru
          _
        // Predicated region
        $region17: #{conv_bn_relu.1} parent=11 // pred_check
          %p124 = pneg %p80
        $region18: #{conv_bn_relu.1} parent=11 // pred_check_branch
          %126 = sbr.rel (%p124) target = $region20
        $region19: #{conv_bn_relu.1} parent=11 // pred_region
          _
        $region20: #{conv_bn_relu.1} parent=11 // pred_fallthru
          _
      $region12: #{conv_bn_relu.1} parent=5 // pred_fallthru
        _
      %p127 = scmp.lt.s32.totalorder %s12, 2
      // Predicated region
      $region21: #{conv_bn_relu.1} parent=5 // pred_check
        %p128 = pneg %p127
      $region22: #{conv_bn_relu.1} parent=5 // pred_check_branch
        %130 = sbr.rel (%p128) target = $region24
      $region23: #{conv_bn_relu.1} parent=5 // pred_region
        // Predicated region
        $region25: #{conv_bn_relu.1} parent=23 // pred_check
          %p131 = pneg %p32
        $region26: #{conv_bn_relu.1} parent=23 // pred_check_branch
          %133 = sbr.rel (%p131) target = $region28
        $region27: #{conv_bn_relu.1} parent=23 // pred_region
          %p134 = scmp.lt.s32.totalorder %s12, 1
          %s135 = scalar_select %p134, %s12, 1
          %s136 = smul.addr %s135, 3
          %s137 = smul.addr %s136, 4
          %s138 = scalar_lea.vmem %s0, %s137
        $region28: #{conv_bn_relu.1} parent=23 // pred_fallthru
          _
      $region24: #{conv_bn_relu.1} parent=5 // pred_fallthru
        _
      %p139 = scmp.le.s32.totalorder 1, %s12
      %p140 = scmp.lt.s32.totalorder %s12, 3
      %p141 = pnand %p139, %p140
      %p142 = pneg %p141
      // Predicated region
      $region29: #{conv_bn_relu.1} parent=5 // pred_check
        _
      $region30: #{conv_bn_relu.1} parent=5 // pred_check_branch
        %144 = sbr.rel (%p141) target = $region32
      $region31: #{conv_bn_relu.1} parent=5 // pred_region
        %s145 = ssub.s32 %s12, 1
        %p146 = scmp.lt.s32.totalorder %s17, 1
        %s147 = scalar_select %p146, %s17, 1
        %s148 = smul.addr %s147, 3
        %s149 = smul.addr %s148, 4
        %s150 = scalar_lea.vmem %s0, %s149
        %p151 = pneg %p38
        %p152 = pneg %p35
        %p153 = pneg %p59
        %p154 = pneg %p56
        %p155 = pneg %p80
        %p156 = pneg %p77
        %p157 = pneg %p106
        %p158 = pneg %p103
        %s159 = sand.u32 %s93, 1
        %s160 = scalar_lea.sflag [#allocation3], %s159
        %s161 = sand.u32 %s93, 1
        %s162 = smul.addr %s161, 16
        %s163 = scalar_lea.vmem [#allocation2], %s162
        %p164 = scmp.lt.s32.totalorder %s17, 1
        %s165 = scalar_select %p164, %s17, 1
        %s166 = smul.addr %s165, 3
        %s167 = smul.addr %s166, 4
        %s168 = scalar_lea.vmem %s0, %s167
        %v169 = vld [vmem:[%s168] sm:$0xff]
        %v170 = vld [vmem:[%s168 + $0x8] sm:$0xf]
        %v172 = vcombine.high %v169, %v169
        %v175 = vcombine.low %v169, %v169
        %v176 = vcombine.low %v170, %v170
        %177 = vrot.lane.b32.xlu0 %v175, 127
        %v178 = vpop.permute.xlu0 %177
        %179 = vrot.lane.b32.xlu0 %v169, 127
        %v180 = vpop.permute.xlu0 %179
        %181 = vrot.lane.b32.xlu0 %v176, 127
        %v182 = vpop.permute.xlu0 %181
        %vm183 = vcmask 1039360
        %v184 = vsel %vm183, %v178, %v180
        %v185 = vsel %vm183, %v180, %v182
        %188 = vrot.lane.b32.xlu0 %v169, 126
        %v189 = vpop.permute.xlu0 %188
        %190 = vrot.lane.b32.xlu0 %v172, 126
        %v191 = vpop.permute.xlu0 %190
        %192 = vrot.lane.b32.xlu0 %v170, 126
        %v193 = vpop.permute.xlu0 %192
        %vm194 = vcmask 1031168
        %v195 = vsel %vm194, %v189, %v191
        %v196 = vsel %vm194, %v191, %v193
        %199 = vrot.lane.b32.xlu0 %v175, 125
        %v200 = vpop.permute.xlu0 %199
        %201 = vrot.lane.b32.xlu0 %v169, 125
        %v202 = vpop.permute.xlu0 %201
        %203 = vrot.lane.b32.xlu0 %v176, 125
        %v204 = vpop.permute.xlu0 %203
        %vm205 = vcmask 1022976
        %v206 = vsel %vm205, %v200, %v202
        %v207 = vsel %vm205, %v202, %v204
        %210 = vrot.lane.b32.xlu0 %v169, 124
        %v211 = vpop.permute.xlu0 %210
        %212 = vrot.lane.b32.xlu0 %v172, 124
        %v213 = vpop.permute.xlu0 %212
        %214 = vrot.lane.b32.xlu0 %v170, 124
        %v215 = vpop.permute.xlu0 %214
        %vm216 = vcmask 1014784
        %v217 = vsel %vm216, %v211, %v213
        %v218 = vsel %vm216, %v213, %v215
        %vm219 = vcmask 1043456
        %v220 = vsel %vm219, %v169, %v184
        %v221 = vsel %vm219, %v172, %v185
        %v222 = vsel %vm219, %v195, %v206
        %v223 = vsel %vm219, %v196, %v207
        %v224 = vld [vmem:[%s1] sm:$0xff]
        %v225 = vld [vmem:[%s2] sm:$0xff]
        %227 = vset.pattern.permute.xlu0 0
        %228 = vperm.xlu0 %227, %v225
        %v229 = vpop.permute.xlu0 %228
        %vm231 = vcmask 162816
        %v233 = vsel %vm231, %v224, 0
        %v235 = vsel %vm219, %v217, 0
        %v237 = vsel %vm219, %v218, 0
        %239 = vmatprep.subr.mxu0 0.0
        %240 = vmatpush1.msra.mxu0 0.0
        %241 = vmatprep.subr.mxu0 0.0
        %242 = vmatpush1.msra.mxu0 0.0
        %243 = vmatprep.subr.mxu0 0.0
        %244 = vmatpush1.msra.mxu0 0.0
        %245 = vmatprep.subr.mxu0 0.0
        %246 = vmatpush1.msra.mxu0 0.0
        %247 = vmatprep.subr.mxu0 0.0
        %248 = vmatpush1.msra.mxu0 0.0
        %249 = vmatprep.subr.mxu0 0.0
        %250 = vmatpush1.msra.mxu0 0.0
        %251 = vmatprep.subr.mxu0 0.0
        %252 = vmatpush1.msra.mxu0 0.0
        %253 = vmatprep.subr.mxu0 0.0
        %254 = vmatpush1.msra.mxu0 0.0
        %255 = vmatprep.subr.mxu0 0.0
        %256 = vmatpush1.msra.mxu0 0.0
        %257 = vmatprep.subr.mxu0 0.0
        %258 = vmatpush1.msra.mxu0 0.0
        %259 = vmatprep.subr.mxu0 0.0
        %260 = vmatpush1.msra.mxu0 0.0
        %261 = vmatprep.subr.mxu0 0.0
        %262 = vmatpush1.msra.mxu0 0.0
        %263 = vmatprep.subr.mxu0 0.0
        %264 = vmatpush1.msra.mxu0 0.0
        %265 = vmatprep.subr.mxu0 %v237
        %266 = vmatpush1.msra.mxu0 %v235
        %267 = vmatprep.subr.mxu0 %v223
        %268 = vmatpush1.msra.mxu0 %v222
        %269 = vmatprep.subr.mxu0 %v221
        %270 = vmatpush1.msra.mxu0 %v220
        %271 = vmatprep.subr.mxu0 0.0
        %272 = vmatpush2.msra.mxu0 0.0
        %273 = vmatprep.subr.mxu0 0.0
        %274 = vmatpush2.msra.mxu0 0.0
        %275 = vmatprep.subr.mxu0 0.0
        %276 = vmatpush2.msra.mxu0 0.0
        %277 = vmatprep.subr.mxu0 0.0
        %278 = vmatpush2.msra.mxu0 0.0
        %279 = vmatprep.subr.mxu0 0.0
        %280 = vmatpush2.msra.mxu0 0.0
        %281 = vmatprep.subr.mxu0 0.0
        %282 = vmatpush2.msra.mxu0 0.0
        %283 = vmatprep.subr.mxu0 0.0
        %284 = vmatpush2.msra.mxu0 0.0
        %285 = vmatprep.subr.mxu0 0.0
        %286 = vmatpush2.msra.mxu0 0.0
        %287 = vmatprep.subr.mxu0 0.0
        %288 = vmatpush2.msra.mxu0 0.0
        %289 = vmatprep.subr.mxu0 0.0
        %290 = vmatpush2.msra.mxu0 0.0
        %291 = vmatprep.subr.mxu0 0.0
        %292 = vmatpush2.msra.mxu0 0.0
        %293 = vmatprep.subr.mxu0 0.0
        %294 = vmatpush2.msra.mxu0 0.0
        %295 = vmatprep.subr.mxu0 0.0
        %296 = vmatpush2.msra.mxu0 0.0
        %297 = vmatprep.subr.mxu0 0.0
        %298 = vmatpush2.msra.mxu0 0.0
        %299 = vmatprep.subr.mxu0 0.0
        %300 = vmatpush2.msra.mxu0 0.0
        %301 = vmatprep.subr.mxu0 0.0
        %302 = vmatpush2.msra.mxu0 0.0
        %303 = vmatprep.mubr.f32.mxu0 0.0
        %304 = vmatmul.mubr.f32.gmra.mxu0 %v233
        %v305 = vpop.f32.mrf.mxu0
        %v306 = vadd.f32 %v229, %v305
        %v307 = vpop.f32.mrf.mxu0
        %v308 = vadd.f32 %v229, %v307
        %309 = vdwg.mxu0
        %v310 = vmax.f32 %v306, 0.0
        %v311 = vmax.f32 %v308, 0.0
        %312 = vst [vmem:[%s163] sm:$0xff] %v310
        %313 = vst [vmem:[%s163 + $0x8] sm:$0xff] %v311
        %s314 = sand.u32 %s93, 1
        %s315 = scalar_lea.sflag [#allocation3], %s314
        %s316 = sand.u32 %s93, 1
        %s317 = smul.addr %s316, 16
        %s318 = scalar_lea.vmem [#allocation2], %s317
        // Predicated region
        $region33: #{conv_bn_relu.1} parent=31 // pred_check
          %p319 = pneg %p103
        $region34: #{conv_bn_relu.1} parent=31 // pred_check_branch
          %321 = sbr.rel (%p319) target = $region36
        $region35: #{conv_bn_relu.1} parent=31 // pred_region
          %s323 = ssub.s32 256, 256
          %324 = vsyncadd %s315, %s323
          %s325 = smul.addr %s17, 2
          %s326 = smul.addr %s325, 128
          %s327 = scalar_lea.hbm %s3, %s326
          %s329 = sshll.u32 %s318, 4
          %s330 = int_to_ptr.vmem [resolvable:$true] %s329
          %332 = dma.vmem_to_hbm [thread:$0]  %s330, 256, %s327, %s315
        $region36: #{conv_bn_relu.1} parent=31 // pred_fallthru
          _
      $region32: #{conv_bn_relu.1} parent=5 // pred_fallthru
        _
      %p333 = scmp.le.s32.totalorder 2, %s12
      // Predicated region
      $region37: #{conv_bn_relu.1} parent=5 // pred_check
        %p334 = pneg %p333
      $region38: #{conv_bn_relu.1} parent=5 // pred_check_branch
        %336 = sbr.rel (%p334) target = $region40
      $region39: #{conv_bn_relu.1} parent=5 // pred_region
        %s337 = ssub.s32 %s12, 2
        // Predicated region
        $region41: #{conv_bn_relu.1} parent=39 // pred_check
          %p338 = pneg %p109
        $region42: #{conv_bn_relu.1} parent=39 // pred_check_branch
          %340 = sbr.rel (%p338) target = $region44
        $region43: #{conv_bn_relu.1} parent=39 // pred_region
          %s341 = sand.u32 %s94, 1
          %s342 = scalar_lea.sflag [#allocation3], %s341
          %s343 = sand.u32 %s94, 1
          %s344 = smul.addr %s343, 16
          %s345 = scalar_lea.vmem [#allocation2], %s344
          %346 = dma.done %s342, 256
        $region44: #{conv_bn_relu.1} parent=39 // pred_fallthru
          _
      $region40: #{conv_bn_relu.1} parent=5 // pred_fallthru
        _
    $region6: #{conv_bn_relu.1} parent=1 // loop_footer
      %s16 = sadd.s32 1, %s12
    $region7: #{conv_bn_relu.1} parent=1 // loop_footer_branch
      %11 = sbr.rel target = $region3
    $region8: #{conv_bn_relu.1} parent=1 // loop_exit
      _
    %347 = vsyncpa [#allocation3], 1
    %s348 = scalar_lea.sflag [#allocation3], 1
    %349 = vsyncpa %s348, 1

</llo_original>
